<compile_context>
chip_gen: v5e
topology: v5e:2x2
jax: 0.10.0
libtpu: 0.0.40
codegen_flags: <defaults>
</compile_context>

<pallas_src>
import jax
import jax.numpy as jnp
from jax import lax
from jax.experimental import pallas as pl
from jax.experimental.pallas import tpu as pltpu

TOK_BLOCK_MAX = 256  # tokens per grid step (multiple of 8)


def _round_up(x, m):
    return (x + m - 1) // m * m


def _embed_kernel(ids_ref, table_hbm, out_ref, copy_sem):
    # ids_ref:   SMEM, (num_tokens_padded,) int32   (scalar prefetch)
    # table_hbm: HBM ref, (vocab, d_model)          (memory_space=pl.ANY)
    # out_ref:   VMEM, (tok_block, d_model) output tile for this grid step
    # copy_sem:  single DMA semaphore shared by all row copies of this step
    tok_block, _ = out_ref.shape
    base = pl.program_id(0) * tok_block

    def start_row(t, carry):
        tok = ids_ref[base + t]
        pltpu.make_async_copy(
            table_hbm.at[pl.ds(tok, 1), :],   # one table row in HBM
            out_ref.at[pl.ds(t, 1), :],       # one row of the output tile
            copy_sem,
        ).start()
        return carry

    lax.fori_loop(0, tok_block, start_row, 0, unroll=False)

    # Wait for all row copies; each wait consumes one row's worth of bytes on
    # the shared semaphore (mirror descriptor, same shape as the started copies).
    def wait_row(t, carry):
        pltpu.make_async_copy(
            table_hbm.at[pl.ds(0, 1), :],
            out_ref.at[pl.ds(0, 1), :],
            copy_sem,
        ).wait()
        return carry

    lax.fori_loop(0, tok_block, wait_row, 0, unroll=False)


def embedder_forward(x_ids, embed_table):
    """x_ids: (batch, seq) integer tokens; embed_table: (vocab, d_model) f32.
    Returns (batch, seq, d_model) float32, identical to nn.Embedding(x.long())."""
    batch, seq = x_ids.shape
    vocab, d_model = embed_table.shape
    num_tokens = batch * seq

    tok_block = min(TOK_BLOCK_MAX, _round_up(num_tokens, 8))
    num_padded = _round_up(num_tokens, tok_block)
    grid = num_padded // tok_block

    ids = x_ids.reshape(num_tokens).astype(jnp.int32)
    # nn.Embedding raises on out-of-range ids; clamp so a bad id can never send
    # the gather DMA outside the table.
    ids = jnp.clip(ids, 0, vocab - 1)
    ids = jnp.pad(ids, (0, num_padded - num_tokens))  # padded tokens -> row 0

    out_flat = pl.pallas_call(
        _embed_kernel,
        out_shape=jax.ShapeDtypeStruct((num_padded, d_model), embed_table.dtype),
        grid_spec=pltpu.PrefetchScalarGridSpec(
            num_scalar_prefetch=1,
            grid=(grid,),
            in_specs=[
                pl.BlockSpec(memory_space=pl.ANY),  # table stays in HBM
            ],
            out_specs=pl.BlockSpec((tok_block, d_model), lambda i, ids: (i, 0)),
            scratch_shapes=[pltpu.SemaphoreType.DMA(())],
        ),
        compiler_params=pltpu.CompilerParams(
            dimension_semantics=("parallel",),
        ),
    )(ids, embed_table)

    return out_flat[:num_tokens].reshape(batch, seq, d_model)


if __name__ == "__main__":
    # Small, forward-consistent shapes.
    batch, seq = 2, 8
    vocab_size, d_model = 32, 128

    key = jax.random.PRNGKey(0)
    k_tab, k_ids = jax.random.split(key)

    # Deterministic parameter init (nn.Embedding default: N(0, 1)).
    embed_table = jax.random.normal(k_tab, (vocab_size, d_model), dtype=jnp.float32)
    x = jax.random.randint(k_ids, (batch, seq), 0, vocab_size, dtype=jnp.int32)

    out = embedder_forward(x, embed_table)
    out = jax.block_until_ready(out)

    # Reference check: plain JAX gather (same semantics as nn.Embedding).
    ref = embed_table[x]
    assert out.shape == (batch, seq, d_model)
    assert out.dtype == jnp.float32
    assert jnp.array_equal(out, ref)

    print("KERNEL_OK")
</pallas_src>

<mosaic_0001>
module attributes {stable_mosaic.version = 11 : i64} {
  func.func @_embed_kernel(%arg0: i32, %arg1: memref<16xi32, #tpu.memory_space<smem>>, %arg2: memref<32x128xf32, #tpu.memory_space<any>>, %arg3: memref<16x128xf32, #tpu.memory_space<vmem>>, %arg4: memref<!tpu.dma_semaphore, #tpu.memory_space<semaphore_mem>>) attributes {dimension_semantics = [#tpu.dimension_semantics<parallel>], iteration_bounds = array<i64: 1>, scalar_prefetch = 1 : i64, scratch_operands = 1 : i64, tpu.core_type = #tpu.core_type<tc>, window_params = [{}, {transform_indices = @transform_1, window_bounds = array<i64: 16, 128>}]} {
    %c16_i32 = arith.constant 16 : i32
    %0 = arith.muli %arg0, %c16_i32 : i32
    %c0_i32 = arith.constant 0 : i32
    %c16_i32_0 = arith.constant 16 : i32
    %1 = arith.addi %c0_i32, %c16_i32_0 : i32
    %c1_i32 = arith.constant 1 : i32
    scf.for %arg5 = %c0_i32 to %1 step %c1_i32  : i32 {
      %3 = arith.addi %0, %arg5 : i32
      %4 = arith.index_cast %3 : i32 to index
      %5 = memref.load %arg1[%4] : memref<16xi32, #tpu.memory_space<smem>>
      %c0_i32_5 = arith.constant 0 : i32
      %6 = tpu.memref_slice %arg2[%5, %c0_i32_5] : memref<32x128xf32, #tpu.memory_space<any>> -> memref<1x128xf32, #tpu.memory_space<any>>
      %c0_i32_6 = arith.constant 0 : i32
      %7 = tpu.memref_slice %arg3[%arg5, %c0_i32_6] : memref<16x128xf32, #tpu.memory_space<vmem>> -> memref<1x128xf32, #tpu.memory_space<vmem>>
      tpu.enqueue_dma source(%6 : memref<1x128xf32, #tpu.memory_space<any>>) target(%7 : memref<1x128xf32, #tpu.memory_space<vmem>>) target_semaphore(%arg4 : memref<!tpu.dma_semaphore, #tpu.memory_space<semaphore_mem>>)
    }
    %c16_i32_1 = arith.constant 16 : i32
    %c0_i32_2 = arith.constant 0 : i32
    %c16_i32_3 = arith.constant 16 : i32
    %2 = arith.addi %c0_i32_2, %c16_i32_3 : i32
    %c1_i32_4 = arith.constant 1 : i32
    scf.for %arg5 = %c0_i32_2 to %2 step %c1_i32_4  : i32 {
      %c0_i32_5 = arith.constant 0 : i32
      %c0_i32_6 = arith.constant 0 : i32
      %3 = tpu.memref_slice %arg2[%c0_i32_5, %c0_i32_6] : memref<32x128xf32, #tpu.memory_space<any>> -> memref<1x128xf32, #tpu.memory_space<any>>
      %c0_i32_7 = arith.constant 0 : i32
      %c0_i32_8 = arith.constant 0 : i32
      %4 = tpu.memref_slice %arg3[%c0_i32_7, %c0_i32_8] : memref<16x128xf32, #tpu.memory_space<vmem>> -> memref<1x128xf32, #tpu.memory_space<vmem>>
      tpu.wait_dma2 semaphore(%arg4 : memref<!tpu.dma_semaphore, #tpu.memory_space<semaphore_mem>>) src(%3 : memref<1x128xf32, #tpu.memory_space<any>>) dst(%4 : memref<1x128xf32, #tpu.memory_space<vmem>>)
    }
    return
  }
  func.func @transform_1(%arg0: i32, %arg1: memref<16xi32, #tpu.memory_space<smem>>) -> (i32, i32) {
    %c0_i32 = arith.constant 0 : i32
    %c0_i32_0 = arith.constant 0 : i32
    return %arg0, %c0_i32 : i32, i32
  }
}

</mosaic_0001>

<llo_original>
// kernel: tpu_custom_call.1
$region0: #{tpu_custom_call.1}
  #allocation0 [shape = 'u32[]', space=smem, size = 0x4, offset = 0x4, fixed_abs, tag = 'smem constant byte address 0x4 - core index']
  #allocation1 [shape = 'u32[72,128]{1,0:T(1,128)}', space=vmem, size = 0x9000, scoped, tag = 'internal scratch']
  #allocation2 [shape = 's32[1]{0}', space=sflag, size = 0x4, scoped, tag = 'scratch operand']
  #allocation3 [shape = 's32[1]{0}', space=sflag, size = 0x4, scoped, tag = 'scoped memory for tpu_custom_call.1']
  #allocation4 [shape = 'u8[512]{0}', space=smem, size = 0x200, scoped, tag = 'prefetched SMEM operand 0']
  #allocation7 [shape = 's32[]', space=sflag, size = 0x4, offset = 0, fixed_abs, tag = 'sflag constant byte address 0x0 - dummy sync flag']
  #allocation8 [shape = 's32[]', space=sflag, size = 0x4, offset = 0, fixed_abs, tag = 'sflag constant byte address 0x0 - dummy sync flag']
  #allocation9 [shape = 'u32[]', space=smem, size = 0x4, offset = 0x44, fixed_abs, tag = 'smem constant byte address 0x44 - assertion arg 0']
  #allocation10 [shape = 'u32[]', space=smem, size = 0x4, offset = 0x48, fixed_abs, tag = 'smem constant byte address 0x48 - assertion arg 1']
  %s0 = inlined_call_operand.hbm [shape: s32[16], index: 0, kind: input, shape index: {}]
  %s1 = inlined_call_operand.hbm [shape: f32[32,128], index: 1, kind: input, shape index: {}]
  %s2 = inlined_call_operand.hbm [shape: f32[16,128], index: 2, kind: output, shape index: {}]
  %s3 = sld [smem:[#allocation0]]
  $region28: #{tpu_custom_call.1} parent=0
    _
  %s5 = ssub.s32 1, %s3
  %s6 = scalar_select 0, %s5, %s3
  %s8 = sshll.u32 %s0, 4
  %s9 = int_to_ptr.hbm [resolvable:$true] %s8
  %11 = dma.hbm_to_smem %s9, 16, [#allocation4], [#allocation3]
  %13 = dma.done [#allocation3], 16
  %14 = sfence
  $region1: #{tpu_custom_call.1} parent=0
    #allocation5 [shape = 'u8[8192]{0}', space=vmem, size = 0x2000, scoped, tag = 'output window, operand 0, single buffered']
    #allocation6 [shape = 's32[1]{0}', space=sflag, size = 0x4, scoped, tag = 'scoped memory for tpu_custom_call.1']
    %15 = vsyncpa [#allocation6], 0
    %s16 = smul.u32 0, 16
    loop: start=0, step=1, limit=16
    $region2: #{tpu_custom_call.1} parent=1 // loop_pre_header
      _
    $region3: #{tpu_custom_call.1} parent=1 // loop_header
      %s18 = sphi 0, %s22
      %p19 = scmp.ge.s32.totalorder %s18, 16
    $region4: #{tpu_custom_call.1} parent=1 // loop_header_branch
      %21 = sbr.rel (%p19) target = $region8
    $region5: #{tpu_custom_call.1} parent=1 // loop_body
      %s23 = sadd.s32 %s16, %s18
      %s24 = sld [smem:[#allocation4 + %s23]]
      %s25 = scalar_lea.hbm %s1, %s24
      %s26 = scalar_lea.vmem [#allocation5], %s18
      // Predicated region
      $region9: #{tpu_custom_call.1} parent=5 // pred_check
        _
      $region10: #{tpu_custom_call.1} parent=5 // pred_check_branch
        %28 = sbr.rel target = $region12
      $region11: #{tpu_custom_call.1} parent=5 // pred_region
        %29 = sst [smem:[#allocation9]] [#allocation8]
        %30 = sst [smem:[#allocation10]] [#allocation7]
      $region12: #{tpu_custom_call.1} parent=5 // pred_fallthru
        _
      %32 = shalt.err (0)
      %s34 = sshll.u32 %s25, 4
      %s35 = int_to_ptr.hbm [resolvable:$true] %s34
      %s36 = sshll.u32 %s26, 4
      %s37 = int_to_ptr.vmem [resolvable:$true] %s36
      %39 = dma.hbm_to_vmem [thread:$0]  %s35, 16, %s37, [#allocation2]
    $region6: #{tpu_custom_call.1} parent=1 // loop_footer
      %s22 = sadd.s32 1, %s18
    $region7: #{tpu_custom_call.1} parent=1 // loop_footer_branch
      %17 = sbr.rel target = $region3
    $region8: #{tpu_custom_call.1} parent=1 // loop_exit
      _
    loop: start=0, step=1, limit=16
    $region13: #{tpu_custom_call.1} parent=1 // loop_pre_header
      _
    $region14: #{tpu_custom_call.1} parent=1 // loop_header
      %s41 = sphi 0, %s45
      %p42 = scmp.ge.s32.totalorder %s41, 16
    $region15: #{tpu_custom_call.1} parent=1 // loop_header_branch
      %44 = sbr.rel (%p42) target = $region19
    $region16: #{tpu_custom_call.1} parent=1 // loop_body
      %s46 = smul.u32 1, 1
      %s47 = sshll.u32 %s46, 4
      %48 = dma.done [#allocation2], %s47
    $region17: #{tpu_custom_call.1} parent=1 // loop_footer
      %s45 = sadd.s32 1, %s41
    $region18: #{tpu_custom_call.1} parent=1 // loop_footer_branch
      %40 = sbr.rel target = $region14
    $region19: #{tpu_custom_call.1} parent=1 // loop_exit
      _
    // Predicated region
    $region20: #{tpu_custom_call.1} parent=1 // pred_check
      _
    $region21: #{tpu_custom_call.1} parent=1 // pred_check_branch
      %50 = sbr.rel (0) target = $region23
    $region22: #{tpu_custom_call.1} parent=1 // pred_region
      %52 = vsyncadd [#allocation6], 0
      %s53 = sshll.u32 [#allocation5], 4
      %s54 = int_to_ptr.vmem [resolvable:$true] %s53
      %s55 = sshll.u32 %s2, 4
      %s56 = int_to_ptr.hbm [resolvable:$true] %s55
      %61 = dma.vmem_to_hbm [thread:$0]  %s54, 256, %s56, [#allocation6], 128, 128, 8
    $region23: #{tpu_custom_call.1} parent=1 // pred_fallthru
      _
    // Predicated region
    $region24: #{tpu_custom_call.1} parent=1 // pred_check
      _
    $region25: #{tpu_custom_call.1} parent=1 // pred_check_branch
      %63 = sbr.rel (0) target = $region27
    $region26: #{tpu_custom_call.1} parent=1 // pred_region
      %65 = dma.done [#allocation6], 256
    $region27: #{tpu_custom_call.1} parent=1 // pred_fallthru
      _
    %66 = vsyncpa [#allocation6], 1
  %67 = vsyncmov [#allocation2]
  %s68 = vpop.sfrf %67
  %p69 = scmp.eq.s32.totalorder %s68, 0
  %p70 = pneg %p69
  %72 = shalt.err (%p70)

</llo_original>
